<compile_context>
chip_gen: v5e
topology: v5e:2x2
jax: 0.10.0
libtpu: 0.0.40
codegen_flags: <defaults>
</compile_context>

<pallas_src>
import functools
import math

import jax
import jax.numpy as jnp
from jax.experimental import pallas as pl
from jax.experimental.pallas import tpu as pltpu

# --- model hyper-parameters (match the PyTorch __init__ defaults) -------------
C = 20                 # number of clusters
HDIM = 16              # hidden dim of the encoder MLP
P_SCALE = 5.0          # observation std
P_MU_INC = 10.0        # mu_z = 10 * z
LOG_2PI = math.log(2.0 * math.pi)
GAUSS_CONST = -math.log(P_SCALE) - 0.5 * LOG_2PI   # additive const of log N(x|mu,sigma^2)
INV_SCALE = 1.0 / P_SCALE

# --- kernel tiling constants ---------------------------------------------------
CHUNK = 512            # lanes per inner chunk: (C, 512) f32 temps stay vreg-resident
MAX_TM = 4096          # outer BlockSpec tile (DMA amortization); well under VMEM limits


def _cdiv(a, b):
    return -(-a // b)


def gmm_kernel(x_ref, w1_ref, b1_ref, w2_ref, b2_ref,
               p_mu_ref, w3_ref,
               qz_ref, diag_ref, *, chunks_per_tile):
    """One M-tile: batch on lanes, clusters on sublanes; compute chunked over lanes."""
    # Tiny constants: load once per tile, keep in vregs across the chunk loop.
    w1 = w1_ref[...]          # (H, 1)
    b1 = b1_ref[...]          # (H, 1)
    w2 = w2_ref[...]          # (C, H)
    b2 = b2_ref[...]          # (C, 1)
    p_mu = p_mu_ref[...]      # (C, 1)
    w3 = w3_ref[...]          # (8, C): rows = [ones, softmax(log_theta_opt), softmax(log_theta), 0...]

    # Static full unroll over lane chunks (equivalent to fori_loop(..., unroll=True));
    # chunk offsets are compile-time constants, so every slice is a static,
    # 128-aligned lane window (unmasked vld/vst) and no temps persist across chunks.
    for j in range(chunks_per_tile):
        col = j * CHUNK
        x = x_ref[:, pl.ds(col, CHUNK)]                                  # (1, CHUNK)

        # ---- encoder MLP eta_phi(x): 1 -> H -> C (lane-dense, tiny MXU matmul) ----
        h = jnp.tanh(w1 * x + b1)                                        # (H, CHUNK)
        logits = jnp.dot(w2, h, preferred_element_type=jnp.float32) + b2  # (C, CHUNK)

        # ---- q(z|x): log-softmax over the cluster (sublane) axis -----------------
        lmax = jnp.max(logits, axis=0, keepdims=True)                    # (1, CHUNK)
        e_q = jnp.exp(logits - lmax)                                     # (C, CHUNK)
        sum_q = jnp.sum(e_q, axis=0, keepdims=True)                      # (1, CHUNK)
        qz = (logits - lmax) - jnp.log(sum_q)                            # (C, CHUNK)
        qz_ref[:, pl.ds(col, CHUNK)] = qz
        # p_q only feeds the posterior-KL diagnostic -> approx reciprocal on the EUP.
        p_q = e_q * pl.reciprocal(sum_q, approx=True)                    # softmax(logits)

        # ---- Gaussian log-lik up to additive const: g = -0.5*((x-mu)/s)^2 --------
        diff = (x - p_mu) * INV_SCALE                                    # (C, CHUNK)
        g = -0.5 * diff * diff
        gmax = jnp.max(g, axis=0, keepdims=True)                         # (1, CHUNK)
        e = jnp.exp(g - gmax)                                            # shared exp pass

        # ---- one small MXU matmul folds the three weighted sublane reductions ----
        #   red[0] = sum(e), red[1] = sum(e*w_opt), red[2] = sum(e*w_model)
        red = jnp.dot(w3, e, preferred_element_type=jnp.float32)         # (8, CHUNK)
        log3 = jnp.log(red[0:3, :])                                      # single EUP pass
        log_denom = log3[0:1, :]

        # ---- posterior KL vs true posterior (tp eliminated algebraically) --------
        # Faithful to the module: log_theta_opt.sum() is a scalar that cancels inside
        # log_softmax, so tp = (g - gmax) - log_denom; with sum(p_q)=1:
        #   sum(p_q*(qz - tp)) = sum(p_q*(qz - g)) + gmax + log_denom
        post_kl = jnp.sum(p_q * (qz - g), axis=0, keepdims=True) + gmax + log_denom

        # ---- log p(x) under optimal / model prior (fused logsumexp) --------------
        logp_true = log3[1:2, :] + gmax + GAUSS_CONST
        logp_model = log3[2:3, :] + gmax + GAUSS_CONST

        # direct per-row stores (no sublane concat); lanes are dense and aligned
        diag_ref[0:1, pl.ds(col, CHUNK)] = post_kl
        diag_ref[1:2, pl.ds(col, CHUNK)] = logp_true
        diag_ref[2:3, pl.ds(col, CHUNK)] = logp_model


def _choose_tiling(m, max_tm=MAX_TM, min_tiles=2):
    """Pick (tile_lanes, num_tiles, padded_m, chunks_per_tile).

    * lane chunks of CHUNK; tile <= max_tm (VMEM-safe on all generations)
    * >= 2 tiles whenever possible so both v7x TensorCores get work
    * padding waste bounded by < 1 chunk per tile (never pad to a full 8K tile)."""
    n_chunks = max(1, _cdiv(m, CHUNK))
    max_cpt = max(1, max_tm // CHUNK)
    if n_chunks == 1:
        num_tiles, cpt = 1, 1
    else:
        num_tiles = max(min_tiles, _cdiv(n_chunks, max_cpt))
        cpt = _cdiv(n_chunks, num_tiles)
    tm_eff = cpt * CHUNK
    m_pad = num_tiles * tm_eff
    return tm_eff, num_tiles, m_pad, cpt


def make_params():
    """Deterministic init matching the PyTorch module, stored in kernel layout."""
    key = jax.random.PRNGKey(0)
    k1, k2, k3 = jax.random.split(key, 3)
    # torch nn.Linear default init: U(-1/sqrt(fan_in), 1/sqrt(fan_in))
    w1_t = jax.random.uniform(k1, (HDIM, 1), jnp.float32, -1.0, 1.0)   # fan_in = 1
    b1_t = jax.random.uniform(k2, (HDIM, 1), jnp.float32, -1.0, 1.0)
    w2_t = jnp.zeros((C, HDIM), jnp.float32)           # phi[-1].weight.data.zero_()
    b2_t = jax.random.uniform(k3, (C, 1), jnp.float32, -0.25, 0.25)    # 1/sqrt(16)
    log_theta = jnp.zeros((1, C), jnp.float32)
    log_theta_opt = jnp.log(5.0 + jnp.arange(C, dtype=jnp.float32)).reshape(1, C)
    p_mu_col = (P_MU_INC * jnp.arange(C, dtype=jnp.float32)).reshape(C, 1)
    return dict(w1_t=w1_t, b1_t=b1_t, w2_t=w2_t, b2_t=b2_t,
                log_theta=log_theta, log_theta_opt=log_theta_opt,
                p_mu_col=p_mu_col)


def gmm_forward(x, params, n_samples=8, sampler="multinomial",
                sample_prior=False, rng=None, max_tm=MAX_TM,
                return_mc_logits=False):
    """Pallas-backed forward pass.  x: (M, 1) float32.

    q(z|x) logits are returned in kernel layout `qz_logits_cm` (C, M); the (M, C)
    transpose (~160 B/sample of extra HBM traffic) is only materialized when
    return_mc_logits=True."""
    m = int(x.shape[0])

    # ---- batch-independent work hoisted out of the kernel (plain JAX, C = 20) ----
    lq = jax.nn.log_softmax(params['log_theta'], axis=-1)        # (1, C)
    lp = jax.nn.log_softmax(params['log_theta_opt'], axis=-1)    # (1, C)
    prior_kl = jnp.sum(jnp.exp(lq) * (lq - lp), axis=-1).mean()  # _kldiv(log_theta, log_theta_opt)
    w_model = jnp.exp(lq)                                        # (1, C) softmax(log_theta)
    w_opt = jnp.exp(lp)                                          # (1, C) softmax(log_theta_opt)
    # W3 folds the three weighted sublane reductions into one MXU matmul inside the kernel.
    w3 = jnp.zeros((8, C), jnp.float32)
    w3 = w3.at[0, :].set(1.0).at[1, :].set(w_opt[0]).at[2, :].set(w_model[0])

    # ---- lane-dense layout: batch on lanes, padded to chunk/tile granularity -----
    tm_eff, num_tiles, m_pad, cpt = _choose_tiling(m, max_tm)
    x_row = jnp.zeros((1, m_pad), jnp.float32).at[0, :m].set(
        x.reshape(m).astype(jnp.float32))

    def full(shape):
        return pl.BlockSpec(shape, lambda i: (0, 0))

    qz_cm, diag = pl.pallas_call(
        functools.partial(gmm_kernel, chunks_per_tile=cpt),
        grid=(num_tiles,),
        out_shape=(
            jax.ShapeDtypeStruct((C, m_pad), jnp.float32),   # q(z|x) logits (clusters, batch)
            jax.ShapeDtypeStruct((3, m_pad), jnp.float32),   # [post_kl; logp_true; logp_model]
        ),
        in_specs=[
            pl.BlockSpec((1, tm_eff), lambda i: (0, i)),     # x tile
            full((HDIM, 1)), full((HDIM, 1)),                # w1, b1
            full((C, HDIM)), full((C, 1)),                   # w2, b2
            full((C, 1)),                                    # p_mu
            full((8, C)),                                    # W3 reduction weights
        ],
        out_specs=(
            pl.BlockSpec((C, tm_eff), lambda i: (0, i)),
            pl.BlockSpec((3, tm_eff), lambda i: (0, i)),
        ),
        compiler_params=pltpu.CompilerParams(
            dimension_semantics=("parallel",)),              # shard M tiles across TCs
    )(x_row, params['w1_t'], params['b1_t'], params['w2_t'], params['b2_t'],
      params['p_mu_col'], w3)

    # padded columns sliced off before any reduction; kernel layout (C, M) is kept.
    qz_cm = qz_cm[:, :m]
    posterior_kl = jnp.mean(diag[0, :m])
    logp_true = jnp.mean(diag[1, :m])
    logp_model = jnp.mean(diag[2, :m])

    # p(z) logits are constant over the batch (torch's .expand is a view too).
    pz_logits = lq                                           # (1, C)

    # ---- sampling glue (plain JAX) -------------------------------------------
    # TODO(synk): vod.multinomial_sample / priority_sample / topk_sample are not
    # available; approximate 'multinomial' with i.i.d. categorical draws and
    # uniform self-normalized importance weights log(1/K).
    if rng is None:
        rng = jax.random.PRNGKey(1)
    if sample_prior:
        # faithful to the module's mapping {True: qz, False: pz}[sample_prior];
        # sample directly in kernel layout (C, M) -> no transpose needed.
        z_s = jax.random.categorical(rng, qz_cm, axis=0, shape=(n_samples, m))
    else:
        z_s = jax.random.categorical(rng, pz_logits, axis=-1, shape=(n_samples, m))
    z = z_s.T                                                # (M, n_samples)
    log_s = jnp.full((m, n_samples), -math.log(float(n_samples)), jnp.float32)

    # px = Normal(loc=p_mu[z], scale=p_scale)
    px_loc = params['p_mu_col'][z]                           # (M, n_samples, 1)
    px_scale = jnp.asarray(P_SCALE, jnp.float32)

    out = {
        'px_loc': px_loc,
        'px_scale': px_scale,
        'z': z,
        'log_s': log_s,
        'qz_logits_cm': qz_cm,        # (C, M) kernel layout — no wrapper transpose
        'pz_logits': pz_logits,       # (1, C) — constant over the batch
        'prior_kl': prior_kl,
        'posterior_kl': posterior_kl,
        'logp_true': logp_true,
        'logp_model': logp_model,
    }
    if return_mc_logits:
        out['qz_logits'] = qz_cm.T    # (M, C), only materialized when requested
    return out


def gmm_reference(x, params):
    """Pure-JAX reference of the diagnostics / q(z|x), for correctness checks."""
    m = x.shape[0]
    xf = x.reshape(m, 1).astype(jnp.float32)
    h = jnp.tanh(xf @ params['w1_t'].T + params['b1_t'].T)            # (M, H)
    logits = h @ params['w2_t'].T + params['b2_t'].T                  # (M, C)
    qz = jax.nn.log_softmax(logits, axis=-1)
    mu = params['p_mu_col'].reshape(1, C)
    g = -0.5 * ((xf - mu) * INV_SCALE) ** 2 + GAUSS_CONST             # log N(x|mu, s)
    lq = jax.nn.log_softmax(params['log_theta'], axis=-1)
    lp = jax.nn.log_softmax(params['log_theta_opt'], axis=-1)
    tp = jax.nn.log_softmax(g, axis=-1)          # scalar log_theta_opt.sum() cancels
    posterior_kl = jnp.mean(jnp.sum(jnp.exp(qz) * (qz - tp), axis=-1))
    logp_true = jnp.mean(jax.scipy.special.logsumexp(lp + g, axis=-1))
    logp_model = jnp.mean(jax.scipy.special.logsumexp(lq + g, axis=-1))
    prior_kl = jnp.sum(jnp.exp(lq) * (lq - lp), axis=-1).mean()
    return dict(qz=qz, posterior_kl=posterior_kl, logp_true=logp_true,
                logp_model=logp_model, prior_kl=prior_kl)


if __name__ == "__main__":
    params = make_params()
    # small batch of scalar observations x: (M, 1), M = 8
    M = 8
    kx = jax.random.PRNGKey(0)
    x = 5.0 * jax.random.normal(kx, (M, 1), jnp.float32) + 50.0

    out = gmm_forward(x, params, n_samples=8, rng=jax.random.PRNGKey(1),
                      return_mc_logits=True)
    jax.block_until_ready(out)

    assert out['qz_logits_cm'].shape == (C, M)
    assert out['qz_logits'].shape == (M, C)
    assert out['pz_logits'].shape == (1, C)
    assert out['z'].shape == (M, 8)
    assert out['px_loc'].shape == (M, 8, 1)
    # q(z|x) logits are normalized (log-softmax) along the cluster axis
    assert bool(jnp.all(jnp.abs(jax.scipy.special.logsumexp(
        out['qz_logits_cm'], axis=0)) < 1e-4))

    ref = gmm_reference(x, params)
    assert bool(jnp.allclose(out['qz_logits'], ref['qz'], atol=2e-3))
    # logp / posterior_kl go through the MXU-folded reduction (default matmul
    # precision) and an approx EUP reciprocal -> loose diagnostic tolerances.
    assert bool(jnp.allclose(out['logp_true'], ref['logp_true'], atol=3e-2))
    assert bool(jnp.allclose(out['logp_model'], ref['logp_model'], atol=3e-2))
    assert bool(jnp.allclose(out['posterior_kl'], ref['posterior_kl'],
                             rtol=5e-2, atol=5e-2))
    assert bool(jnp.allclose(out['prior_kl'], ref['prior_kl'], atol=1e-6))
    assert bool(jnp.isfinite(out['logp_true']))
    assert bool(jnp.isfinite(out['logp_model']))
    assert bool(jnp.isfinite(out['prior_kl']))
    assert bool(jnp.isfinite(out['posterior_kl']))

    print("KERNEL_OK")
</pallas_src>

<mosaic_0001>
module attributes {stable_mosaic.version = 11 : i64} {
  func.func @gmm_kernel(%arg0: i32, %arg1: memref<1x512xf32, #tpu.memory_space<vmem>>, %arg2: memref<16x1xf32, #tpu.memory_space<vmem>>, %arg3: memref<16x1xf32, #tpu.memory_space<vmem>>, %arg4: memref<20x16xf32, #tpu.memory_space<vmem>>, %arg5: memref<20x1xf32, #tpu.memory_space<vmem>>, %arg6: memref<20x1xf32, #tpu.memory_space<vmem>>, %arg7: memref<8x20xf32, #tpu.memory_space<vmem>>, %arg8: memref<20x512xf32, #tpu.memory_space<vmem>>, %arg9: memref<3x512xf32, #tpu.memory_space<vmem>>) attributes {dimension_semantics = [#tpu.dimension_semantics<parallel>], iteration_bounds = array<i64: 1>, scalar_prefetch = 0 : i64, scratch_operands = 0 : i64, tpu.core_type = #tpu.core_type<tc>, window_params = [{transform_indices = @transform_0, window_bounds = array<i64: 1, 512>}, {pipeline_mode = #tpu.pipeline_mode<synchronous>, transform_indices = @transform_1, window_bounds = array<i64: 16, 1>}, {pipeline_mode = #tpu.pipeline_mode<synchronous>, transform_indices = @transform_2, window_bounds = array<i64: 16, 1>}, {pipeline_mode = #tpu.pipeline_mode<synchronous>, transform_indices = @transform_3, window_bounds = array<i64: 20, 16>}, {pipeline_mode = #tpu.pipeline_mode<synchronous>, transform_indices = @transform_4, window_bounds = array<i64: 20, 1>}, {pipeline_mode = #tpu.pipeline_mode<synchronous>, transform_indices = @transform_5, window_bounds = array<i64: 20, 1>}, {pipeline_mode = #tpu.pipeline_mode<synchronous>, transform_indices = @transform_6, window_bounds = array<i64: 8, 20>}, {transform_indices = @transform_7, window_bounds = array<i64: 20, 512>}, {transform_indices = @transform_8, window_bounds = array<i64: 3, 512>}]} {
    %c0 = arith.constant 0 : index
    %c0_0 = arith.constant 0 : index
    %0 = vector.load %arg2[%c0, %c0_0] : memref<16x1xf32, #tpu.memory_space<vmem>>, vector<16x1xf32>
    %c0_1 = arith.constant 0 : index
    %c0_2 = arith.constant 0 : index
    %1 = vector.load %arg3[%c0_1, %c0_2] : memref<16x1xf32, #tpu.memory_space<vmem>>, vector<16x1xf32>
    %c0_3 = arith.constant 0 : index
    %c0_4 = arith.constant 0 : index
    %2 = vector.load %arg4[%c0_3, %c0_4] : memref<20x16xf32, #tpu.memory_space<vmem>>, vector<20x16xf32>
    %c0_5 = arith.constant 0 : index
    %c0_6 = arith.constant 0 : index
    %3 = vector.load %arg5[%c0_5, %c0_6] : memref<20x1xf32, #tpu.memory_space<vmem>>, vector<20x1xf32>
    %c0_7 = arith.constant 0 : index
    %c0_8 = arith.constant 0 : index
    %4 = vector.load %arg6[%c0_7, %c0_8] : memref<20x1xf32, #tpu.memory_space<vmem>>, vector<20x1xf32>
    %c0_9 = arith.constant 0 : index
    %c0_10 = arith.constant 0 : index
    %5 = vector.load %arg7[%c0_9, %c0_10] : memref<8x20xf32, #tpu.memory_space<vmem>>, vector<8x20xf32>
    %c0_11 = arith.constant 0 : index
    %c0_12 = arith.constant 0 : index
    %6 = vector.load %arg1[%c0_11, %c0_12] : memref<1x512xf32, #tpu.memory_space<vmem>>, vector<1x512xf32>
    %7 = vector.broadcast %0 : vector<16x1xf32> to vector<16x512xf32>
    %8 = vector.broadcast %6 : vector<1x512xf32> to vector<16x512xf32>
    %9 = arith.mulf %7, %8 : vector<16x512xf32>
    %10 = vector.broadcast %1 : vector<16x1xf32> to vector<16x512xf32>
    %11 = arith.addf %9, %10 : vector<16x512xf32>
    %12 = math.tanh %11 : vector<16x512xf32>
    %cst = arith.constant dense<0.000000e+00> : vector<20x512xf32>
    %13 = tpu.matmul %2, %12, %cst {dimension_numbers = #tpu.dot_dimension_numbers<[1], [0], [0], [1], [0, 0, 1, 1], [], []>} : vector<20x16xf32>, vector<16x512xf32>, vector<20x512xf32> -> vector<20x512xf32>
    %14 = vector.broadcast %3 : vector<20x1xf32> to vector<20x512xf32>
    %15 = arith.addf %13, %14 : vector<20x512xf32>
    %cst_13 = arith.constant dense<0xFF800000> : vector<512xf32>
    %16 = vector.multi_reduction <maximumf>, %15, %cst_13 [0] : vector<20x512xf32> to vector<512xf32>
    %17 = vector.shape_cast %16 : vector<512xf32> to vector<1x512xf32>
    %18 = vector.broadcast %17 : vector<1x512xf32> to vector<20x512xf32>
    %19 = arith.subf %15, %18 : vector<20x512xf32>
    %20 = math.exp %19 : vector<20x512xf32>
    %cst_14 = arith.constant dense<0.000000e+00> : vector<512xf32>
    %21 = vector.multi_reduction <add>, %20, %cst_14 [0] : vector<20x512xf32> to vector<512xf32>
    %22 = vector.shape_cast %21 : vector<512xf32> to vector<1x512xf32>
    %23 = vector.broadcast %17 : vector<1x512xf32> to vector<20x512xf32>
    %24 = arith.subf %15, %23 : vector<20x512xf32>
    %25 = math.log %22 : vector<1x512xf32>
    %26 = vector.broadcast %25 : vector<1x512xf32> to vector<20x512xf32>
    %27 = arith.subf %24, %26 : vector<20x512xf32>
    %c0_15 = arith.constant 0 : index
    %c0_16 = arith.constant 0 : index
    %28 = vector.load %arg8[%c0_15, %c0_16] : memref<20x512xf32, #tpu.memory_space<vmem>>, vector<20x512xf32>
    tpu.vector_store %arg8[%c0_15, %c0_16], %27 {strides = array<i32>} : memref<20x512xf32, #tpu.memory_space<vmem>>, vector<20x512xf32>,
    %29 = tpu.reciprocal %22 {approx = true} : vector<1x512xf32> -> vector<1x512xf32>
    %30 = vector.broadcast %29 : vector<1x512xf32> to vector<20x512xf32>
    %31 = arith.mulf %20, %30 : vector<20x512xf32>
    %32 = vector.broadcast %6 : vector<1x512xf32> to vector<20x512xf32>
    %33 = vector.broadcast %4 : vector<20x1xf32> to vector<20x512xf32>
    %34 = arith.subf %32, %33 : vector<20x512xf32>
    %cst_17 = arith.constant 2.000000e-01 : f32
    %35 = vector.broadcast %cst_17 : f32 to vector<20x512xf32>
    %36 = arith.mulf %34, %35 : vector<20x512xf32>
    %cst_18 = arith.constant -5.000000e-01 : f32
    %37 = vector.broadcast %cst_18 : f32 to vector<20x512xf32>
    %38 = arith.mulf %37, %36 : vector<20x512xf32>
    %39 = arith.mulf %38, %36 : vector<20x512xf32>
    %cst_19 = arith.constant dense<0xFF800000> : vector<512xf32>
    %40 = vector.multi_reduction <maximumf>, %39, %cst_19 [0] : vector<20x512xf32> to vector<512xf32>
    %41 = vector.shape_cast %40 : vector<512xf32> to vector<1x512xf32>
    %42 = vector.broadcast %41 : vector<1x512xf32> to vector<20x512xf32>
    %43 = arith.subf %39, %42 : vector<20x512xf32>
    %44 = math.exp %43 : vector<20x512xf32>
    %cst_20 = arith.constant dense<0.000000e+00> : vector<8x512xf32>
    %45 = tpu.matmul %5, %44, %cst_20 {dimension_numbers = #tpu.dot_dimension_numbers<[1], [0], [0], [1], [0, 0, 1, 1], [], []>} : vector<8x20xf32>, vector<20x512xf32>, vector<8x512xf32> -> vector<8x512xf32>
    %46 = vector.extract_strided_slice %45 {offsets = [0, 0], sizes = [3, 512], strides = [1, 1]} : vector<8x512xf32> to vector<3x512xf32>
    %47 = math.log %46 : vector<3x512xf32>
    %48 = vector.extract_strided_slice %47 {offsets = [0, 0], sizes = [1, 512], strides = [1, 1]} : vector<3x512xf32> to vector<1x512xf32>
    %49 = arith.subf %27, %39 : vector<20x512xf32>
    %50 = arith.mulf %31, %49 : vector<20x512xf32>
    %cst_21 = arith.constant dense<0.000000e+00> : vector<512xf32>
    %51 = vector.multi_reduction <add>, %50, %cst_21 [0] : vector<20x512xf32> to vector<512xf32>
    %52 = vector.shape_cast %51 : vector<512xf32> to vector<1x512xf32>
    %53 = arith.addf %52, %41 : vector<1x512xf32>
    %54 = arith.addf %53, %48 : vector<1x512xf32>
    %55 = vector.extract_strided_slice %47 {offsets = [1, 0], sizes = [1, 512], strides = [1, 1]} : vector<3x512xf32> to vector<1x512xf32>
    %56 = arith.addf %55, %41 : vector<1x512xf32>
    %cst_22 = arith.constant -2.52837634 : f32
    %57 = vector.broadcast %cst_22 : f32 to vector<1x512xf32>
    %58 = arith.addf %56, %57 : vector<1x512xf32>
    %59 = vector.extract_strided_slice %47 {offsets = [2, 0], sizes = [1, 512], strides = [1, 1]} : vector<3x512xf32> to vector<1x512xf32>
    %60 = arith.addf %59, %41 : vector<1x512xf32>
    %cst_23 = arith.constant -2.52837634 : f32
    %61 = vector.broadcast %cst_23 : f32 to vector<1x512xf32>
    %62 = arith.addf %60, %61 : vector<1x512xf32>
    %c0_24 = arith.constant 0 : index
    %c0_25 = arith.constant 0 : index
    %63 = vector.load %arg9[%c0_24, %c0_25] : memref<3x512xf32, #tpu.memory_space<vmem>>, vector<1x512xf32>
    tpu.vector_store %arg9[%c0_24, %c0_25], %54 {strides = array<i32>} : memref<3x512xf32, #tpu.memory_space<vmem>>, vector<1x512xf32>,
    %c1 = arith.constant 1 : index
    %c0_26 = arith.constant 0 : index
    %64 = vector.load %arg9[%c1, %c0_26] : memref<3x512xf32, #tpu.memory_space<vmem>>, vector<1x512xf32>
    tpu.vector_store %arg9[%c1, %c0_26], %58 {strides = array<i32>} : memref<3x512xf32, #tpu.memory_space<vmem>>, vector<1x512xf32>,
    %c2 = arith.constant 2 : index
    %c0_27 = arith.constant 0 : index
    %65 = vector.load %arg9[%c2, %c0_27] : memref<3x512xf32, #tpu.memory_space<vmem>>, vector<1x512xf32>
    tpu.vector_store %arg9[%c2, %c0_27], %62 {strides = array<i32>} : memref<3x512xf32, #tpu.memory_space<vmem>>, vector<1x512xf32>,
    return
  }
  func.func @transform_0(%arg0: i32) -> (i32, i32) {
    %c0_i32 = arith.constant 0 : i32
    %c0_i32_0 = arith.constant 0 : i32
    return %c0_i32, %arg0 : i32, i32
  }
  func.func @transform_1(%arg0: i32) -> (i32, i32) {
    %c0_i32 = arith.constant 0 : i32
    %c0_i32_0 = arith.constant 0 : i32
    %c0_i32_1 = arith.constant 0 : i32
    return %c0_i32, %c0_i32_0 : i32, i32
  }
  func.func @transform_2(%arg0: i32) -> (i32, i32) {
    %c0_i32 = arith.constant 0 : i32
    %c0_i32_0 = arith.constant 0 : i32
    %c0_i32_1 = arith.constant 0 : i32
    return %c0_i32, %c0_i32_0 : i32, i32
  }
  func.func @transform_3(%arg0: i32) -> (i32, i32) {
    %c0_i32 = arith.constant 0 : i32
    %c0_i32_0 = arith.constant 0 : i32
    %c0_i32_1 = arith.constant 0 : i32
    return %c0_i32, %c0_i32_0 : i32, i32
  }
  func.func @transform_4(%arg0: i32) -> (i32, i32) {
    %c0_i32 = arith.constant 0 : i32
    %c0_i32_0 = arith.constant 0 : i32
    %c0_i32_1 = arith.constant 0 : i32
    return %c0_i32, %c0_i32_0 : i32, i32
  }
  func.func @transform_5(%arg0: i32) -> (i32, i32) {
    %c0_i32 = arith.constant 0 : i32
    %c0_i32_0 = arith.constant 0 : i32
    %c0_i32_1 = arith.constant 0 : i32
    return %c0_i32, %c0_i32_0 : i32, i32
  }
  func.func @transform_6(%arg0: i32) -> (i32, i32) {
    %c0_i32 = arith.constant 0 : i32
    %c0_i32_0 = arith.constant 0 : i32
    %c0_i32_1 = arith.constant 0 : i32
    return %c0_i32, %c0_i32_0 : i32, i32
  }
  func.func @transform_7(%arg0: i32) -> (i32, i32) {
    %c0_i32 = arith.constant 0 : i32
    %c0_i32_0 = arith.constant 0 : i32
    return %c0_i32, %arg0 : i32, i32
  }
  func.func @transform_8(%arg0: i32) -> (i32, i32) {
    %c0_i32 = arith.constant 0 : i32
    %c0_i32_0 = arith.constant 0 : i32
    return %c0_i32, %arg0 : i32, i32
  }
}

</mosaic_0001>

<llo_original>
// kernel: tpu_custom_call.1
$region0: #{tpu_custom_call.1}
  #allocation0 [shape = 'u32[]', space=smem, size = 0x4, offset = 0x4, fixed_abs, tag = 'smem constant byte address 0x4 - core index']
  #allocation1 [shape = 'u32[72,128]{1,0:T(1,128)}', space=vmem, size = 0x9000, scoped, tag = 'internal scratch']
  %s0 = inlined_call_operand.vmem [shape: f32[1,512], index: 0, kind: input, shape index: {}]
  %s1 = inlined_call_operand.vmem [shape: f32[16,1], index: 1, kind: input, shape index: {}]
  %s2 = inlined_call_operand.vmem [shape: f32[16,1], index: 2, kind: input, shape index: {}]
  %s3 = inlined_call_operand.vmem [shape: f32[20,16], index: 3, kind: input, shape index: {}]
  %s4 = inlined_call_operand.vmem [shape: f32[20,1], index: 4, kind: input, shape index: {}]
  %s5 = inlined_call_operand.vmem [shape: f32[20,1], index: 5, kind: input, shape index: {}]
  %s6 = inlined_call_operand.vmem [shape: f32[8,20], index: 6, kind: input, shape index: {}]
  %s7 = inlined_call_operand.hbm [shape: f32[20,512], index: 7, kind: output, shape index: {0}]
  %s8 = inlined_call_operand.hbm [shape: f32[3,512], index: 8, kind: output, shape index: {1}]
  %9 = xla_tuple %s7, %s8
  %s10 = sld [smem:[#allocation0]]
  $region46: #{tpu_custom_call.1} parent=0
    _
  %s12 = ssub.s32 1, %s10
  %s13 = scalar_select 0, %s12, %s10
  $region1: #{tpu_custom_call.1} parent=0
    #allocation2 [shape = 'u8[49152]{0}', space=vmem, size = 0xc000, scoped, tag = 'output window, operand 0, single buffered']
    #allocation3 [shape = 's32[1]{0}', space=sflag, size = 0x4, scoped, tag = 'scoped memory for tpu_custom_call.1']
    #allocation4 [shape = 'u8[8192]{0}', space=vmem, size = 0x2000, scoped, tag = 'output window, operand 1, single buffered']
    #allocation5 [shape = 's32[1]{0}', space=sflag, size = 0x4, scoped, tag = 'scoped memory for tpu_custom_call.1']
    %14 = vsyncpa [#allocation3], 0
    %15 = vsyncpa [#allocation5], 0
    // Predicated region
    $region2: #{tpu_custom_call.1} parent=1 // pred_check
      _
    $region3: #{tpu_custom_call.1} parent=1 // pred_check_branch
      %17 = sbr.rel (0) target = $region5
    $region4: #{tpu_custom_call.1} parent=1 // pred_region
      _
    $region5: #{tpu_custom_call.1} parent=1 // pred_fallthru
      _
    // Predicated region
    $region6: #{tpu_custom_call.1} parent=1 // pred_check
      _
    $region7: #{tpu_custom_call.1} parent=1 // pred_check_branch
      %19 = sbr.rel (0) target = $region9
    $region8: #{tpu_custom_call.1} parent=1 // pred_region
      _
    $region9: #{tpu_custom_call.1} parent=1 // pred_fallthru
      _
    // Predicated region
    $region10: #{tpu_custom_call.1} parent=1 // pred_check
      _
    $region11: #{tpu_custom_call.1} parent=1 // pred_check_branch
      %21 = sbr.rel (0) target = $region13
    $region12: #{tpu_custom_call.1} parent=1 // pred_region
      _
    $region13: #{tpu_custom_call.1} parent=1 // pred_fallthru
      _
    // Predicated region
    $region14: #{tpu_custom_call.1} parent=1 // pred_check
      _
    $region15: #{tpu_custom_call.1} parent=1 // pred_check_branch
      %23 = sbr.rel (0) target = $region17
    $region16: #{tpu_custom_call.1} parent=1 // pred_region
      _
    $region17: #{tpu_custom_call.1} parent=1 // pred_fallthru
      _
    // Predicated region
    $region18: #{tpu_custom_call.1} parent=1 // pred_check
      _
    $region19: #{tpu_custom_call.1} parent=1 // pred_check_branch
      %25 = sbr.rel (0) target = $region21
    $region20: #{tpu_custom_call.1} parent=1 // pred_region
      _
    $region21: #{tpu_custom_call.1} parent=1 // pred_fallthru
      _
    // Predicated region
    $region22: #{tpu_custom_call.1} parent=1 // pred_check
      _
    $region23: #{tpu_custom_call.1} parent=1 // pred_check_branch
      %27 = sbr.rel (0) target = $region25
    $region24: #{tpu_custom_call.1} parent=1 // pred_region
      _
    $region25: #{tpu_custom_call.1} parent=1 // pred_fallthru
      _
    // Predicated region
    $region26: #{tpu_custom_call.1} parent=1 // pred_check
      _
    $region27: #{tpu_custom_call.1} parent=1 // pred_check_branch
      %29 = sbr.rel (0) target = $region29
    $region28: #{tpu_custom_call.1} parent=1 // pred_region
      _
    $region29: #{tpu_custom_call.1} parent=1 // pred_fallthru
      _
    %v30 = vld [vmem:[%s1] sm:$0xff]
    %v31 = vld [vmem:[%s1 + $0x8] sm:$0xff]
    %v32 = vld [vmem:[%s2] sm:$0xff]
    %v33 = vld [vmem:[%s2 + $0x8] sm:$0xff]
    %v34 = vld [vmem:[%s3] sm:$0xff]
    %v35 = vld [vmem:[%s3 + $0x8] sm:$0xff]
    %v36 = vld [vmem:[%s3 + $0x10] sm:$0xf]
    %v37 = vld [vmem:[%s4] sm:$0xff]
    %v38 = vld [vmem:[%s4 + $0x8] sm:$0xff]
    %v39 = vld [vmem:[%s4 + $0x10] sm:$0xf]
    %v40 = vld [vmem:[%s5] sm:$0xff]
    %v41 = vld [vmem:[%s5 + $0x8] sm:$0xff]
    %v42 = vld [vmem:[%s5 + $0x10] sm:$0xf]
    %v43 = vld [vmem:[%s6] sm:$0xff]
    %v44 = vld [vmem:[%s0] sm:$0xf]
    %46 = vset.pattern.permute.xlu0 0
    %47 = vperm.xlu0 %46, %v30
    %v48 = vpop.permute.xlu0 %47
    %51 = vset.pattern.permute.xlu0 0
    %52 = vperm.xlu0 %51, %v31
    %v53 = vpop.permute.xlu0 %52
    %v56 = vperm.slane %v44, 0
    %v57 = vperm.slane %v44, 1
    %v58 = vperm.slane %v44, 2
    %v59 = vperm.slane %v44, 3
    %v64 = vmul.f32 %v48, %v56
    %v65 = vmul.f32 %v48, %v57
    %v66 = vmul.f32 %v48, %v58
    %v67 = vmul.f32 %v48, %v59
    %v68 = vmul.f32 %v53, %v56
    %v69 = vmul.f32 %v53, %v57
    %v70 = vmul.f32 %v53, %v58
    %v71 = vmul.f32 %v53, %v59
    %73 = vset.pattern.permute.xlu0 0
    %74 = vperm.xlu0 %73, %v32
    %v75 = vpop.permute.xlu0 %74
    %78 = vset.pattern.permute.xlu0 0
    %79 = vperm.xlu0 %78, %v33
    %v80 = vpop.permute.xlu0 %79
    %v82 = vadd.f32 %v64, %v75
    %v83 = vadd.f32 %v65, %v75
    %v84 = vadd.f32 %v66, %v75
    %v85 = vadd.f32 %v67, %v75
    %v86 = vadd.f32 %v68, %v80
    %v87 = vadd.f32 %v69, %v80
    %v88 = vadd.f32 %v70, %v80
    %v89 = vadd.f32 %v71, %v80
    %v90 = vtanh.pop %v82
    %v91 = vtanh.pop %v83
    %v92 = vtanh.pop %v84
    %v93 = vtanh.pop %v85
    %v94 = vtanh.pop %v86
    %v95 = vtanh.pop %v87
    %v96 = vtanh.pop %v88
    %v97 = vtanh.pop %v89
    %99 = vset.pattern.permute.xlu0 0
    %100 = vperm.xlu0 %99, %v37
    %v101 = vpop.permute.xlu0 %100
    %104 = vset.pattern.permute.xlu0 0
    %105 = vperm.xlu0 %104, %v38
    %v106 = vpop.permute.xlu0 %105
    %109 = vset.pattern.permute.xlu0 0
    %110 = vperm.xlu0 %109, %v39
    %v111 = vpop.permute.xlu0 %110
    %vm113 = vcmask 130048
    %v115 = vsel %vm113, %v34, 0
    %v118 = vsel %vm113, %v35, 0
    %v121 = vsel %vm113, %v36, 0
    %123 = vmatpush.msra.mxu0 0.0
    %124 = vmatpush.msra.mxu0 0.0
    %125 = vmatpush.msra.mxu0 0.0
    %126 = vmatpush.msra.mxu0 0.0
    %127 = vmatpush.msra.mxu0 0.0
    %128 = vmatpush.msra.mxu0 0.0
    %129 = vmatpush.msra.mxu0 0.0
    %130 = vmatpush.msra.mxu0 0.0
    %131 = vmatpush.msra.mxu0 0.0
    %132 = vmatpush.msra.mxu0 0.0
    %133 = vmatpush.msra.mxu0 0.0
    %134 = vmatpush.msra.mxu0 0.0
    %135 = vmatpush.msra.mxu0 0.0
    %136 = vmatpush.msra.mxu0 0.0
    %137 = vmatpush.msra.mxu0 %v94
    %138 = vmatpush.msra.mxu0 %v90
    %139 = vmatmul.f32.gmra.mxu0 %v115
    %v140 = vpop.f32.mrf.mxu0
    %v141 = vadd.f32 %v101, %v140
    %142 = vmatmul.f32.gmra.mxu0 %v118
    %v143 = vpop.f32.mrf.mxu0
    %v144 = vadd.f32 %v106, %v143
    %145 = vmatmul.f32.gmra.mxu0 %v121
    %v146 = vpop.f32.mrf.mxu0
    %v147 = vadd.f32 %v111, %v146
    %148 = vdwg.mxu0
    %149 = vmatpush.msra.mxu0 0.0
    %150 = vmatpush.msra.mxu0 0.0
    %151 = vmatpush.msra.mxu0 0.0
    %152 = vmatpush.msra.mxu0 0.0
    %153 = vmatpush.msra.mxu0 0.0
    %154 = vmatpush.msra.mxu0 0.0
    %155 = vmatpush.msra.mxu0 0.0
    %156 = vmatpush.msra.mxu0 0.0
    %157 = vmatpush.msra.mxu0 0.0
    %158 = vmatpush.msra.mxu0 0.0
    %159 = vmatpush.msra.mxu0 0.0
    %160 = vmatpush.msra.mxu0 0.0
    %161 = vmatpush.msra.mxu0 0.0
    %162 = vmatpush.msra.mxu0 0.0
    %163 = vmatpush.msra.mxu0 %v95
    %164 = vmatpush.msra.mxu0 %v91
    %165 = vmatmul.f32.gmra.mxu0 %v115
    %v166 = vpop.f32.mrf.mxu0
    %v167 = vadd.f32 %v101, %v166
    %168 = vmatmul.f32.gmra.mxu0 %v118
    %v169 = vpop.f32.mrf.mxu0
    %v170 = vadd.f32 %v106, %v169
    %171 = vmatmul.f32.gmra.mxu0 %v121
    %v172 = vpop.f32.mrf.mxu0
    %v173 = vadd.f32 %v111, %v172
    %174 = vdwg.mxu0
    %175 = vmatpush.msra.mxu0 0.0
    %176 = vmatpush.msra.mxu0 0.0
    %177 = vmatpush.msra.mxu0 0.0
    %178 = vmatpush.msra.mxu0 0.0
    %179 = vmatpush.msra.mxu0 0.0
    %180 = vmatpush.msra.mxu0 0.0
    %181 = vmatpush.msra.mxu0 0.0
    %182 = vmatpush.msra.mxu0 0.0
    %183 = vmatpush.msra.mxu0 0.0
    %184 = vmatpush.msra.mxu0 0.0
    %185 = vmatpush.msra.mxu0 0.0
    %186 = vmatpush.msra.mxu0 0.0
    %187 = vmatpush.msra.mxu0 0.0
    %188 = vmatpush.msra.mxu0 0.0
    %189 = vmatpush.msra.mxu0 %v96
    %190 = vmatpush.msra.mxu0 %v92
    %191 = vmatmul.f32.gmra.mxu0 %v115
    %v192 = vpop.f32.mrf.mxu0
    %v193 = vadd.f32 %v101, %v192
    %194 = vmatmul.f32.gmra.mxu0 %v118
    %v195 = vpop.f32.mrf.mxu0
    %v196 = vadd.f32 %v106, %v195
    %197 = vmatmul.f32.gmra.mxu0 %v121
    %v198 = vpop.f32.mrf.mxu0
    %v199 = vadd.f32 %v111, %v198
    %200 = vdwg.mxu0
    %201 = vmatpush.msra.mxu0 0.0
    %202 = vmatpush.msra.mxu0 0.0
    %203 = vmatpush.msra.mxu0 0.0
    %204 = vmatpush.msra.mxu0 0.0
    %205 = vmatpush.msra.mxu0 0.0
    %206 = vmatpush.msra.mxu0 0.0
    %207 = vmatpush.msra.mxu0 0.0
    %208 = vmatpush.msra.mxu0 0.0
    %209 = vmatpush.msra.mxu0 0.0
    %210 = vmatpush.msra.mxu0 0.0
    %211 = vmatpush.msra.mxu0 0.0
    %212 = vmatpush.msra.mxu0 0.0
    %213 = vmatpush.msra.mxu0 0.0
    %214 = vmatpush.msra.mxu0 0.0
    %215 = vmatpush.msra.mxu0 %v97
    %216 = vmatpush.msra.mxu0 %v93
    %217 = vmatmul.f32.gmra.mxu0 %v115
    %v218 = vpop.f32.mrf.mxu0
    %v219 = vadd.f32 %v101, %v218
    %220 = vmatmul.f32.gmra.mxu0 %v118
    %v221 = vpop.f32.mrf.mxu0
    %v222 = vadd.f32 %v106, %v221
    %223 = vmatmul.f32.gmra.mxu0 %v121
    %v224 = vpop.f32.mrf.mxu0
    %v225 = vadd.f32 %v111, %v224
    %226 = vdwg.mxu0
    %v227 = vmax.f32 %v141, %v144
    %vm228 = vcmask 1043456
    %v229 = vsel %vm228, %v147, -inf
    %v230 = vmax.f32 %v227, %v229
    %v231 = vrot.slane %v230, 4
    %v232 = vmax.f32 %v230, %v231
    %v233 = vrot.slane %v232, 2
    %v234 = vmax.f32 %v232, %v233
    %v235 = vrot.slane %v234, 1
    %v236 = vmax.f32 %v234, %v235
    %v237 = vmax.f32 %v167, %v170
    %v238 = vsel %vm228, %v173, -inf
    %v239 = vmax.f32 %v237, %v238
    %v240 = vrot.slane %v239, 4
    %v241 = vmax.f32 %v239, %v240
    %v242 = vrot.slane %v241, 2
    %v243 = vmax.f32 %v241, %v242
    %v244 = vrot.slane %v243, 1
    %v245 = vmax.f32 %v243, %v244
    %v246 = vmax.f32 %v193, %v196
    %v247 = vsel %vm228, %v199, -inf
    %v248 = vmax.f32 %v246, %v247
    %v249 = vrot.slane %v248, 4
    %v250 = vmax.f32 %v248, %v249
    %v251 = vrot.slane %v250, 2
    %v252 = vmax.f32 %v250, %v251
    %v253 = vrot.slane %v252, 1
    %v254 = vmax.f32 %v252, %v253
    %v255 = vmax.f32 %v219, %v222
    %v256 = vsel %vm228, %v225, -inf
    %v257 = vmax.f32 %v255, %v256
    %v258 = vrot.slane %v257, 4
    %v259 = vmax.f32 %v257, %v258
    %v260 = vrot.slane %v259, 2
    %v261 = vmax.f32 %v259, %v260
    %v262 = vrot.slane %v261, 1
    %v263 = vmax.f32 %v261, %v262
    %v264 = vsub.f32 %v141, %v236
    %v265 = vsub.f32 %v167, %v245
    %v266 = vsub.f32 %v193, %v254
    %v267 = vsub.f32 %v219, %v263
    %v268 = vsub.f32 %v144, %v236
    %v269 = vsub.f32 %v170, %v245
    %v270 = vsub.f32 %v196, %v254
    %v271 = vsub.f32 %v222, %v263
    %v272 = vsub.f32 %v147, %v236
    %v273 = vsub.f32 %v173, %v245
    %v274 = vsub.f32 %v199, %v254
    %v275 = vsub.f32 %v225, %v263
    %v276 = vmul.f32 %v264, 1.442695
    %v277 = vpow.pop %v276
    %v278 = vmul.f32 %v265, 1.442695
    %v279 = vpow.pop %v278
    %v280 = vmul.f32 %v266, 1.442695
    %v281 = vpow.pop %v280
    %v282 = vmul.f32 %v267, 1.442695
    %v283 = vpow.pop %v282
    %v284 = vmul.f32 %v268, 1.442695
    %v285 = vpow.pop %v284
    %v286 = vmul.f32 %v269, 1.442695
    %v287 = vpow.pop %v286
    %v288 = vmul.f32 %v270, 1.442695
    %v289 = vpow.pop %v288
    %v290 = vmul.f32 %v271, 1.442695
    %v291 = vpow.pop %v290
    %v292 = vmul.f32 %v272, 1.442695
    %v293 = vpow.pop %v292
    %v294 = vmul.f32 %v273, 1.442695
    %v295 = vpow.pop %v294
    %v296 = vmul.f32 %v274, 1.442695
    %v297 = vpow.pop %v296
    %v298 = vmul.f32 %v275, 1.442695
    %v299 = vpow.pop %v298
    %v300 = vadd.f32 %v277, %v285
    %v301 = vsel %vm228, %v293, 0.0
    %v302 = vadd.f32 %v300, %v301
    %v303 = vrot.slane %v302, 4
    %v304 = vadd.f32 %v302, %v303
    %v305 = vrot.slane %v304, 2
    %v306 = vadd.f32 %v304, %v305
    %v307 = vrot.slane %v306, 1
    %v308 = vadd.f32 %v306, %v307
    %v309 = vadd.f32 %v279, %v287
    %v310 = vsel %vm228, %v295, 0.0
    %v311 = vadd.f32 %v309, %v310
    %v312 = vrot.slane %v311, 4
    %v313 = vadd.f32 %v311, %v312
    %v314 = vrot.slane %v313, 2
    %v315 = vadd.f32 %v313, %v314
    %v316 = vrot.slane %v315, 1
    %v317 = vadd.f32 %v315, %v316
    %v318 = vadd.f32 %v281, %v289
    %v319 = vsel %vm228, %v297, 0.0
    %v320 = vadd.f32 %v318, %v319
    %v321 = vrot.slane %v320, 4
    %v322 = vadd.f32 %v320, %v321
    %v323 = vrot.slane %v322, 2
    %v324 = vadd.f32 %v322, %v323
    %v325 = vrot.slane %v324, 1
    %v326 = vadd.f32 %v324, %v325
    %v327 = vadd.f32 %v283, %v291
    %v328 = vsel %vm228, %v299, 0.0
    %v329 = vadd.f32 %v327, %v328
    %v330 = vrot.slane %v329, 4
    %v331 = vadd.f32 %v329, %v330
    %v332 = vrot.slane %v331, 2
    %v333 = vadd.f32 %v331, %v332
    %v334 = vrot.slane %v333, 1
    %v335 = vadd.f32 %v333, %v334
    %v336 = vlog2.pop %v308
    %v337 = vmul.f32 %v336, 0.6931472
    %v338 = vlog2.pop %v317
    %v339 = vmul.f32 %v338, 0.6931472
    %v340 = vlog2.pop %v326
    %v341 = vmul.f32 %v340, 0.6931472
    %v342 = vlog2.pop %v335
    %v343 = vmul.f32 %v342, 0.6931472
    %v344 = vsub.f32 %v264, %v337
    %v345 = vsub.f32 %v265, %v339
    %v346 = vsub.f32 %v266, %v341
    %v347 = vsub.f32 %v267, %v343
    %v348 = vsub.f32 %v268, %v337
    %v349 = vsub.f32 %v269, %v339
    %v350 = vsub.f32 %v270, %v341
    %v351 = vsub.f32 %v271, %v343
    %v352 = vsub.f32 %v272, %v337
    %v353 = vsub.f32 %v273, %v339
    %v354 = vsub.f32 %v274, %v341
    %v355 = vsub.f32 %v275, %v343
    %356 = vst [vmem:[#allocation2] sm:$0xff] %v344
    %357 = vst [vmem:[#allocation2 + $0x8] sm:$0xff] %v345
    %358 = vst [vmem:[#allocation2 + $0x10] sm:$0xff] %v346
    %359 = vst [vmem:[#allocation2 + $0x18] sm:$0xff] %v347
    %360 = vst [vmem:[#allocation2 + $0x20] sm:$0xff] %v348
    %361 = vst [vmem:[#allocation2 + $0x28] sm:$0xff] %v349
    %362 = vst [vmem:[#allocation2 + $0x30] sm:$0xff] %v350
    %363 = vst [vmem:[#allocation2 + $0x38] sm:$0xff] %v351
    %364 = vst [vmem:[#allocation2 + $0x40] sm:$0xf] %v352
    %365 = vst [vmem:[#allocation2 + $0x48] sm:$0xf] %v353
    %366 = vst [vmem:[#allocation2 + $0x50] sm:$0xf] %v354
    %367 = vst [vmem:[#allocation2 + $0x58] sm:$0xf] %v355
    %v368 = vrcp.pop %v308
    %v369 = vrcp.pop %v317
    %v370 = vrcp.pop %v326
    %v371 = vrcp.pop %v335
    %v372 = vmul.f32 %v277, %v368
    %v373 = vmul.f32 %v279, %v369
    %v374 = vmul.f32 %v281, %v370
    %v375 = vmul.f32 %v283, %v371
    %v376 = vmul.f32 %v285, %v368
    %v377 = vmul.f32 %v287, %v369
    %v378 = vmul.f32 %v289, %v370
    %v379 = vmul.f32 %v291, %v371
    %v380 = vmul.f32 %v293, %v368
    %v381 = vmul.f32 %v295, %v369
    %v382 = vmul.f32 %v297, %v370
    %v383 = vmul.f32 %v299, %v371
    %385 = vset.pattern.permute.xlu0 0
    %386 = vperm.xlu0 %385, %v40
    %v387 = vpop.permute.xlu0 %386
    %390 = vset.pattern.permute.xlu0 0
    %391 = vperm.xlu0 %390, %v41
    %v392 = vpop.permute.xlu0 %391
    %395 = vset.pattern.permute.xlu0 0
    %396 = vperm.xlu0 %395, %v42
    %v397 = vpop.permute.xlu0 %396
    %v399 = vsub.f32 %v56, %v387
    %v400 = vsub.f32 %v57, %v387
    %v401 = vsub.f32 %v58, %v387
    %v402 = vsub.f32 %v59, %v387
    %v403 = vsub.f32 %v56, %v392
    %v404 = vsub.f32 %v57, %v392
    %v405 = vsub.f32 %v58, %v392
    %v406 = vsub.f32 %v59, %v392
    %v407 = vsub.f32 %v56, %v397
    %v408 = vsub.f32 %v57, %v397
    %v409 = vsub.f32 %v58, %v397
    %v410 = vsub.f32 %v59, %v397
    %v411 = vmul.f32 %v399, 0.2
    %v412 = vmul.f32 %v400, 0.2
    %v413 = vmul.f32 %v401, 0.2
    %v414 = vmul.f32 %v402, 0.2
    %v415 = vmul.f32 %v403, 0.2
    %v416 = vmul.f32 %v404, 0.2
    %v417 = vmul.f32 %v405, 0.2
    %v418 = vmul.f32 %v406, 0.2
    %v419 = vmul.f32 %v407, 0.2
    %v420 = vmul.f32 %v408, 0.2
    %v421 = vmul.f32 %v409, 0.2
    %v422 = vmul.f32 %v410, 0.2
    %v423 = vmul.f32 %v411, -0.5
    %v424 = vmul.f32 %v412, -0.5
    %v425 = vmul.f32 %v413, -0.5
    %v426 = vmul.f32 %v414, -0.5
    %v427 = vmul.f32 %v415, -0.5
    %v428 = vmul.f32 %v416, -0.5
    %v429 = vmul.f32 %v417, -0.5
    %v430 = vmul.f32 %v418, -0.5
    %v431 = vmul.f32 %v419, -0.5
    %v432 = vmul.f32 %v420, -0.5
    %v433 = vmul.f32 %v421, -0.5
    %v434 = vmul.f32 %v422, -0.5
    %v435 = vmul.f32 %v423, %v411
    %v436 = vmul.f32 %v424, %v412
    %v437 = vmul.f32 %v425, %v413
    %v438 = vmul.f32 %v426, %v414
    %v439 = vmul.f32 %v427, %v415
    %v440 = vmul.f32 %v428, %v416
    %v441 = vmul.f32 %v429, %v417
    %v442 = vmul.f32 %v430, %v418
    %v443 = vmul.f32 %v431, %v419
    %v444 = vmul.f32 %v432, %v420
    %v445 = vmul.f32 %v433, %v421
    %v446 = vmul.f32 %v434, %v422
    %v447 = vmax.f32 %v435, %v439
    %v448 = vsel %vm228, %v443, -inf
    %v449 = vmax.f32 %v447, %v448
    %v450 = vrot.slane %v449, 4
    %v451 = vmax.f32 %v449, %v450
    %v452 = vrot.slane %v451, 2
    %v453 = vmax.f32 %v451, %v452
    %v454 = vrot.slane %v453, 1
    %v455 = vmax.f32 %v453, %v454
    %v456 = vmax.f32 %v436, %v440
    %v457 = vsel %vm228, %v444, -inf
    %v458 = vmax.f32 %v456, %v457
    %v459 = vrot.slane %v458, 4
    %v460 = vmax.f32 %v458, %v459
    %v461 = vrot.slane %v460, 2
    %v462 = vmax.f32 %v460, %v461
    %v463 = vrot.slane %v462, 1
    %v464 = vmax.f32 %v462, %v463
    %v465 = vmax.f32 %v437, %v441
    %v466 = vsel %vm228, %v445, -inf
    %v467 = vmax.f32 %v465, %v466
    %v468 = vrot.slane %v467, 4
    %v469 = vmax.f32 %v467, %v468
    %v470 = vrot.slane %v469, 2
    %v471 = vmax.f32 %v469, %v470
    %v472 = vrot.slane %v471, 1
    %v473 = vmax.f32 %v471, %v472
    %v474 = vmax.f32 %v438, %v442
    %v475 = vsel %vm228, %v446, -inf
    %v476 = vmax.f32 %v474, %v475
    %v477 = vrot.slane %v476, 4
    %v478 = vmax.f32 %v476, %v477
    %v479 = vrot.slane %v478, 2
    %v480 = vmax.f32 %v478, %v479
    %v481 = vrot.slane %v480, 1
    %v482 = vmax.f32 %v480, %v481
    %v483 = vsub.f32 %v435, %v455
    %v484 = vsub.f32 %v436, %v464
    %v485 = vsub.f32 %v437, %v473
    %v486 = vsub.f32 %v438, %v482
    %v487 = vsub.f32 %v439, %v455
    %v488 = vsub.f32 %v440, %v464
    %v489 = vsub.f32 %v441, %v473
    %v490 = vsub.f32 %v442, %v482
    %v491 = vsub.f32 %v443, %v455
    %v492 = vsub.f32 %v444, %v464
    %v493 = vsub.f32 %v445, %v473
    %v494 = vsub.f32 %v446, %v482
    %v495 = vmul.f32 %v483, 1.442695
    %v496 = vpow.pop %v495
    %v497 = vmul.f32 %v484, 1.442695
    %v498 = vpow.pop %v497
    %v499 = vmul.f32 %v485, 1.442695
    %v500 = vpow.pop %v499
    %v501 = vmul.f32 %v486, 1.442695
    %v502 = vpow.pop %v501
    %v503 = vmul.f32 %v487, 1.442695
    %v504 = vpow.pop %v503
    %v505 = vmul.f32 %v488, 1.442695
    %v506 = vpow.pop %v505
    %v507 = vmul.f32 %v489, 1.442695
    %v508 = vpow.pop %v507
    %v509 = vmul.f32 %v490, 1.442695
    %v510 = vpow.pop %v509
    %v511 = vmul.f32 %v491, 1.442695
    %v512 = vpow.pop %v511
    %v513 = vmul.f32 %v492, 1.442695
    %v514 = vpow.pop %v513
    %v515 = vmul.f32 %v493, 1.442695
    %v516 = vpow.pop %v515
    %v517 = vmul.f32 %v494, 1.442695
    %v518 = vpow.pop %v517
    %vm519 = vcmask 162816
    %v521 = vsel %vm519, %v43, 0
    %v524 = vsel %vm228, %v512, 0
    %v527 = vsel %vm228, %v514, 0
    %v530 = vsel %vm228, %v516, 0
    %v533 = vsel %vm228, %v518, 0
    %535 = vmatpush.msra.mxu0 0.0
    %536 = vmatpush.msra.mxu0 0.0
    %537 = vmatpush.msra.mxu0 0.0
    %538 = vmatpush.msra.mxu0 0.0
    %539 = vmatpush.msra.mxu0 0.0
    %540 = vmatpush.msra.mxu0 0.0
    %541 = vmatpush.msra.mxu0 0.0
    %542 = vmatpush.msra.mxu0 0.0
    %543 = vmatpush.msra.mxu0 0.0
    %544 = vmatpush.msra.mxu0 0.0
    %545 = vmatpush.msra.mxu0 0.0
    %546 = vmatpush.msra.mxu0 0.0
    %547 = vmatpush.msra.mxu0 0.0
    %548 = vmatpush.msra.mxu0 %v524
    %549 = vmatpush.msra.mxu0 %v504
    %550 = vmatpush.msra.mxu0 %v496
    %551 = vmatmul.f32.gmra.mxu0 %v521
    %v552 = vpop.f32.mrf.mxu0
    %v553 = vadd.f32 0.0, %v552
    %554 = vdwg.mxu0
    %555 = vmatpush.msra.mxu0 0.0
    %556 = vmatpush.msra.mxu0 0.0
    %557 = vmatpush.msra.mxu0 0.0
    %558 = vmatpush.msra.mxu0 0.0
    %559 = vmatpush.msra.mxu0 0.0
    %560 = vmatpush.msra.mxu0 0.0
    %561 = vmatpush.msra.mxu0 0.0
    %562 = vmatpush.msra.mxu0 0.0
    %563 = vmatpush.msra.mxu0 0.0
    %564 = vmatpush.msra.mxu0 0.0
    %565 = vmatpush.msra.mxu0 0.0
    %566 = vmatpush.msra.mxu0 0.0
    %567 = vmatpush.msra.mxu0 0.0
    %568 = vmatpush.msra.mxu0 %v527
    %569 = vmatpush.msra.mxu0 %v506
    %570 = vmatpush.msra.mxu0 %v498
    %571 = vmatmul.f32.gmra.mxu0 %v521
    %v572 = vpop.f32.mrf.mxu0
    %v573 = vadd.f32 0.0, %v572
    %574 = vdwg.mxu0
    %575 = vmatpush.msra.mxu0 0.0
    %576 = vmatpush.msra.mxu0 0.0
    %577 = vmatpush.msra.mxu0 0.0
    %578 = vmatpush.msra.mxu0 0.0
    %579 = vmatpush.msra.mxu0 0.0
    %580 = vmatpush.msra.mxu0 0.0
    %581 = vmatpush.msra.mxu0 0.0
    %582 = vmatpush.msra.mxu0 0.0
    %583 = vmatpush.msra.mxu0 0.0
    %584 = vmatpush.msra.mxu0 0.0
    %585 = vmatpush.msra.mxu0 0.0
    %586 = vmatpush.msra.mxu0 0.0
    %587 = vmatpush.msra.mxu0 0.0
    %588 = vmatpush.msra.mxu0 %v530
    %589 = vmatpush.msra.mxu0 %v508
    %590 = vmatpush.msra.mxu0 %v500
    %591 = vmatmul.f32.gmra.mxu0 %v521
    %v592 = vpop.f32.mrf.mxu0
    %v593 = vadd.f32 0.0, %v592
    %594 = vdwg.mxu0
    %595 = vmatpush.msra.mxu0 0.0
    %596 = vmatpush.msra.mxu0 0.0
    %597 = vmatpush.msra.mxu0 0.0
    %598 = vmatpush.msra.mxu0 0.0
    %599 = vmatpush.msra.mxu0 0.0
    %600 = vmatpush.msra.mxu0 0.0
    %601 = vmatpush.msra.mxu0 0.0
    %602 = vmatpush.msra.mxu0 0.0
    %603 = vmatpush.msra.mxu0 0.0
    %604 = vmatpush.msra.mxu0 0.0
    %605 = vmatpush.msra.mxu0 0.0
    %606 = vmatpush.msra.mxu0 0.0
    %607 = vmatpush.msra.mxu0 0.0
    %608 = vmatpush.msra.mxu0 %v533
    %609 = vmatpush.msra.mxu0 %v510
    %610 = vmatpush.msra.mxu0 %v502
    %611 = vmatmul.f32.gmra.mxu0 %v521
    %v612 = vpop.f32.mrf.mxu0
    %v613 = vadd.f32 0.0, %v612
    %614 = vdwg.mxu0
    %v615 = vlog2.pop %v553
    %v616 = vmul.f32 %v615, 0.6931472
    %v617 = vlog2.pop %v573
    %v618 = vmul.f32 %v617, 0.6931472
    %v619 = vlog2.pop %v593
    %v620 = vmul.f32 %v619, 0.6931472
    %v621 = vlog2.pop %v613
    %v622 = vmul.f32 %v621, 0.6931472
    %v623 = vsub.f32 %v344, %v435
    %v624 = vsub.f32 %v345, %v436
    %v625 = vsub.f32 %v346, %v437
    %v626 = vsub.f32 %v347, %v438
    %v627 = vsub.f32 %v348, %v439
    %v628 = vsub.f32 %v349, %v440
    %v629 = vsub.f32 %v350, %v441
    %v630 = vsub.f32 %v351, %v442
    %v631 = vsub.f32 %v352, %v443
    %v632 = vsub.f32 %v353, %v444
    %v633 = vsub.f32 %v354, %v445
    %v634 = vsub.f32 %v355, %v446
    %v635 = vmul.f32 %v372, %v623
    %v636 = vmul.f32 %v373, %v624
    %v637 = vmul.f32 %v374, %v625
    %v638 = vmul.f32 %v375, %v626
    %v639 = vmul.f32 %v376, %v627
    %v640 = vmul.f32 %v377, %v628
    %v641 = vmul.f32 %v378, %v629
    %v642 = vmul.f32 %v379, %v630
    %v643 = vmul.f32 %v380, %v631
    %v644 = vmul.f32 %v381, %v632
    %v645 = vmul.f32 %v382, %v633
    %v646 = vmul.f32 %v383, %v634
    %v647 = vadd.f32 %v635, %v639
    %v648 = vsel %vm228, %v643, 0.0
    %v649 = vadd.f32 %v647, %v648
    %v650 = vrot.slane %v649, 4
    %v651 = vadd.f32 %v649, %v650
    %v652 = vrot.slane %v651, 2
    %v653 = vadd.f32 %v651, %v652
    %v654 = vrot.slane %v653, 1
    %v655 = vadd.f32 %v653, %v654
    %v656 = vadd.f32 %v636, %v640
    %v657 = vsel %vm228, %v644, 0.0
    %v658 = vadd.f32 %v656, %v657
    %v659 = vrot.slane %v658, 4
    %v660 = vadd.f32 %v658, %v659
    %v661 = vrot.slane %v660, 2
    %v662 = vadd.f32 %v660, %v661
    %v663 = vrot.slane %v662, 1
    %v664 = vadd.f32 %v662, %v663
    %v665 = vadd.f32 %v637, %v641
    %v666 = vsel %vm228, %v645, 0.0
    %v667 = vadd.f32 %v665, %v666
    %v668 = vrot.slane %v667, 4
    %v669 = vadd.f32 %v667, %v668
    %v670 = vrot.slane %v669, 2
    %v671 = vadd.f32 %v669, %v670
    %v672 = vrot.slane %v671, 1
    %v673 = vadd.f32 %v671, %v672
    %v674 = vadd.f32 %v638, %v642
    %v675 = vsel %vm228, %v646, 0.0
    %v676 = vadd.f32 %v674, %v675
    %v677 = vrot.slane %v676, 4
    %v678 = vadd.f32 %v676, %v677
    %v679 = vrot.slane %v678, 2
    %v680 = vadd.f32 %v678, %v679
    %v681 = vrot.slane %v680, 1
    %v682 = vadd.f32 %v680, %v681
    %v683 = vadd.f32 %v655, %v455
    %v684 = vadd.f32 %v664, %v464
    %v685 = vadd.f32 %v673, %v473
    %v686 = vadd.f32 %v682, %v482
    %v687 = vadd.f32 %v683, %v616
    %v688 = vadd.f32 %v684, %v618
    %v689 = vadd.f32 %v685, %v620
    %v690 = vadd.f32 %v686, %v622
    %v691 = vadd.f32 %v616, %v455
    %v692 = vadd.f32 %v618, %v464
    %v693 = vadd.f32 %v620, %v473
    %v694 = vadd.f32 %v622, %v482
    %v695 = vadd.f32 %v691, -2.5283763
    %v696 = vadd.f32 %v692, -2.5283763
    %v697 = vadd.f32 %v693, -2.5283763
    %v698 = vadd.f32 %v694, -2.5283763
    %v703 = vrot.slane %v688, 7
    %v704 = vrot.slane %v689, 6
    %v705 = vrot.slane %v690, 5
    %vm706 = vcmask 1040384
    %v707 = vsel %vm706, %v687, %v703
    %vm708 = vcmask 1042434
    %v709 = vsel %vm708, %v704, %v705
    %vm710 = vcmask 1041408
    %v711 = vsel %vm710, %v707, %v709
    %v713 = vlaneseq
    %vm714 = vcmp.ge.s32.totalorder %v713, 0
    %vm715 = vcmp.lt.s32.totalorder %v713, 512
    %vm716 = vmand %vm714, %vm715
    %717 = vst.msk [vmem:[#allocation4] ss:$4 sm:$0xf] %vm716, %v711
    %722 = vst [vmem:[#allocation1] sm:$0xff] %v695
    %723 = vst [vmem:[#allocation1 + $0x9] sm:$0xff] %v696
    %724 = vst [vmem:[#allocation1 + $0x12] sm:$0xff] %v697
    %725 = vst [vmem:[#allocation1 + $0x1b] sm:$0xff] %v698
    %s726 = scalar_lea.vmem [#allocation1], 1
    %v727 = vld [vmem:[%s726] ss:$9 sm:$0xff]
    %s729 = scalar_lea.vmem [#allocation4], 1
    %730 = vst.msk [vmem:[%s729] ss:$4 sm:$0xf] %vm716, %v727
    %731 = vst [vmem:[#allocation1] sm:$0xff] %v695
    %732 = vst [vmem:[#allocation1 + $0x9] sm:$0xff] %v696
    %733 = vst [vmem:[#allocation1 + $0x12] sm:$0xff] %v697
    %734 = vst [vmem:[#allocation1 + $0x1b] sm:$0xff] %v698
    %s735 = scalar_lea.vmem [#allocation1], 2
    %v736 = vld [vmem:[%s735] ss:$9 sm:$0xff]
    %s738 = scalar_lea.vmem [#allocation4], 2
    %739 = vst.msk [vmem:[%s738] ss:$4 sm:$0xf] %vm716, %v736
    // Predicated region
    $region30: #{tpu_custom_call.1} parent=1 // pred_check
      _
    $region31: #{tpu_custom_call.1} parent=1 // pred_check_branch
      %741 = sbr.rel (0) target = $region33
    $region32: #{tpu_custom_call.1} parent=1 // pred_region
      %743 = vsyncadd [#allocation3], 0
      %s744 = sshll.u32 [#allocation2], 4
      %s745 = int_to_ptr.vmem [resolvable:$true] %s744
      %s746 = sshll.u32 %s7, 4
      %s747 = int_to_ptr.hbm [resolvable:$true] %s746
      %752 = dma.vmem_to_hbm [thread:$0]  %s745, 1536, %s747, [#allocation3], 512, 512, 32
    $region33: #{tpu_custom_call.1} parent=1 // pred_fallthru
      _
    // Predicated region
    $region34: #{tpu_custom_call.1} parent=1 // pred_check
      _
    $region35: #{tpu_custom_call.1} parent=1 // pred_check_branch
      %754 = sbr.rel (0) target = $region37
    $region36: #{tpu_custom_call.1} parent=1 // pred_region
      %756 = vsyncadd [#allocation5], 0
      %s758 = sshll.u32 [#allocation4], 4
      %s759 = int_to_ptr.vmem [resolvable:$true] %s758
      %s760 = sshll.u32 %s8, 4
      %s761 = int_to_ptr.hbm [resolvable:$true] %s760
      %763 = dma.vmem_to_hbm [thread:$0]  %s759, 256, %s761, [#allocation5]
    $region37: #{tpu_custom_call.1} parent=1 // pred_fallthru
      _
    // Predicated region
    $region38: #{tpu_custom_call.1} parent=1 // pred_check
      _
    $region39: #{tpu_custom_call.1} parent=1 // pred_check_branch
      %765 = sbr.rel (0) target = $region41
    $region40: #{tpu_custom_call.1} parent=1 // pred_region
      %767 = dma.done [#allocation3], 1536
    $region41: #{tpu_custom_call.1} parent=1 // pred_fallthru
      _
    // Predicated region
    $region42: #{tpu_custom_call.1} parent=1 // pred_check
      _
    $region43: #{tpu_custom_call.1} parent=1 // pred_check_branch
      %769 = sbr.rel (0) target = $region45
    $region44: #{tpu_custom_call.1} parent=1 // pred_region
      %771 = dma.done [#allocation5], 256
    $region45: #{tpu_custom_call.1} parent=1 // pred_fallthru
      _
    %772 = vsyncpa [#allocation3], 1
    %773 = vsyncpa [#allocation5], 1

</llo_original>
